<compile_context>
chip_gen: v7x
topology: tpu7x:2x2x1
jax: 0.10.0
libtpu: 0.0.40
codegen_flags: <defaults>
</compile_context>

<pallas_src>
import jax
import jax.numpy as jnp
from jax.experimental import pallas as pl
from jax.experimental.pallas import tpu as pltpu

SUBLANE = 8


def _round_up(n, m):
    return ((n + m - 1) // m) * m


def nbeats_block_kernel(
    x_ref,
    w1_ref, b1_ref,
    w2_ref, b2_ref,
    w3_ref, b3_ref,
    w4b_ref, b4b_ref,
    w4f_ref, b4f_ref,
    backcast_ref, forecast_ref,
):
    x = x_ref[...]

    # fc trunk: Linear -> ReLU -> Linear -> ReLU -> Linear -> ReLU
    h = jnp.dot(x, w1_ref[...], preferred_element_type=jnp.float32) + b1_ref[...]
    h = jnp.maximum(h, 0.0)
    h = jnp.dot(h, w2_ref[...], preferred_element_type=jnp.float32) + b2_ref[...]
    h = jnp.maximum(h, 0.0)
    h = jnp.dot(h, w3_ref[...], preferred_element_type=jnp.float32) + b3_ref[...]
    h = jnp.maximum(h, 0.0)

    # theta layer fused into the two basis Linears at init (no nonlinearity
    # between them), so the last two matmuls are independent, not serial.
    bc = jnp.dot(h, w4b_ref[...], preferred_element_type=jnp.float32) + b4b_ref[...]
    fc = jnp.dot(h, w4f_ref[...], preferred_element_type=jnp.float32) + b4f_ref[...]
    backcast_ref[...] = bc.astype(backcast_ref.dtype)
    forecast_ref[...] = fc.astype(forecast_ref.dtype)


def fuse_params(params):
    """One-time (init-time) prep: fold the theta Linear into both basis Linears.

    w4b = w4 @ wb, b4b = b4 @ wb + bb   (and the same for the forecast basis),
    so the kernel never sees theta explicitly.  Call this once, outside the
    per-step hot path.
    """
    fused = dict(
        w1=params["w1"], b1=params["b1"],
        w2=params["w2"], b2=params["b2"],
        w3=params["w3"], b3=params["b3"],
        w4b=params["w4"] @ params["wb"],
        b4b=params["b4"] @ params["wb"] + params["bb"],
        w4f=params["w4"] @ params["wf"],
        b4f=params["b4"] @ params["wf"] + params["bf"],
    )
    # Materialize now so nothing is recomputed per forward call.
    return jax.tree_util.tree_map(jnp.asarray, fused)


def _choose_tile_b(batch, tile_b):
    """Pick a sublane-aligned batch tile; keep >=2 grid steps when possible."""
    tile_b = max(SUBLANE, min(tile_b, _round_up(batch, SUBLANE)))
    if batch > SUBLANE:
        # Clamp so grid >= 2: on v7x the ("parallel",) axis then uses both TCs.
        half = _round_up(pl.cdiv(batch, 2), SUBLANE)
        tile_b = min(tile_b, half)
    return tile_b


def nbeats_block_forward(x, fused_params, *, tile_b=1024):
    """x: [batch, input_size] float32.  fused_params: output of fuse_params()."""
    batch, input_size = x.shape
    forecast_horizon = fused_params["w4f"].shape[1]

    tb = _choose_tile_b(batch, tile_b)
    grid = (pl.cdiv(batch, tb),)   # ragged last tile handled by masked boundary block

    weight_args = (
        fused_params["w1"], fused_params["b1"],
        fused_params["w2"], fused_params["b2"],
        fused_params["w3"], fused_params["b3"],
        fused_params["w4b"], fused_params["b4b"],
        fused_params["w4f"], fused_params["b4f"],
    )

    def pinned_spec(arr):
        # Whole-array block, constant index -> DMA'd once, stays VMEM-resident.
        return pl.BlockSpec(arr.shape, lambda i: (0, 0))

    in_specs = [pl.BlockSpec((tb, input_size), lambda i: (i, 0))]
    in_specs += [pinned_spec(a) for a in weight_args]
    out_specs = (
        pl.BlockSpec((tb, input_size), lambda i: (i, 0)),
        pl.BlockSpec((tb, forecast_horizon), lambda i: (i, 0)),
    )
    out_shape = (
        jax.ShapeDtypeStruct((batch, input_size), jnp.float32),
        jax.ShapeDtypeStruct((batch, forecast_horizon), jnp.float32),
    )

    backcast, forecast = pl.pallas_call(
        nbeats_block_kernel,
        out_shape=out_shape,
        grid=grid,
        in_specs=in_specs,
        out_specs=out_specs,
        compiler_params=pltpu.CompilerParams(
            dimension_semantics=("parallel",),
            vmem_limit_bytes=32 * 1024 * 1024,
        ),
    )(x, *weight_args)
    return backcast, forecast


def init_params(key, input_size, forecast_horizon, hidden_size, theta_size):
    """Deterministic synthetic init (weights as [in, out], biases as [1, out])."""
    keys = jax.random.split(key, 12)

    def lin(kw, kb, fan_in, fan_out):
        scale = 1.0 / jnp.sqrt(jnp.float32(fan_in))
        w = jax.random.uniform(kw, (fan_in, fan_out), jnp.float32, -scale, scale)
        b = jax.random.uniform(kb, (1, fan_out), jnp.float32, -scale, scale)
        return w, b

    w1, b1 = lin(keys[0], keys[1], input_size, hidden_size)
    w2, b2 = lin(keys[2], keys[3], hidden_size, hidden_size)
    w3, b3 = lin(keys[4], keys[5], hidden_size, hidden_size)
    w4, b4 = lin(keys[6], keys[7], hidden_size, theta_size)
    wb, bb = lin(keys[8], keys[9], theta_size, input_size)
    wf, bf = lin(keys[10], keys[11], theta_size, forecast_horizon)
    return dict(w1=w1, b1=b1, w2=w2, b2=b2, w3=w3, b3=b3, w4=w4, b4=b4,
                wb=wb, bb=bb, wf=wf, bf=bf)


def reference_forward(x, p):
    """Pure-JAX reference mirroring the PyTorch module semantics exactly."""
    h = jnp.maximum(x @ p["w1"] + p["b1"], 0.0)
    h = jnp.maximum(h @ p["w2"] + p["b2"], 0.0)
    h = jnp.maximum(h @ p["w3"] + p["b3"], 0.0)
    theta = h @ p["w4"] + p["b4"]
    return theta @ p["wb"] + p["bb"], theta @ p["wf"] + p["bf"]


if __name__ == "__main__":
    input_size = 16
    forecast_horizon = 8
    hidden_size = 32
    theta_size = 8
    batch = 4

    key = jax.random.PRNGKey(0)
    k_x, k_p, k_x2 = jax.random.split(key, 3)
    params = init_params(k_p, input_size, forecast_horizon, hidden_size, theta_size)
    fused_params = fuse_params(params)

    # Small-shape run (exercises the ragged single-tile path).
    x = jax.random.normal(k_x, (batch, input_size), dtype=jnp.float32)
    backcast, forecast = nbeats_block_forward(x, fused_params)
    jax.block_until_ready((backcast, forecast))

    backcast_ref, forecast_ref = reference_forward(x, params)
    assert backcast.shape == (batch, input_size)
    assert forecast.shape == (batch, forecast_horizon)
    assert jnp.allclose(backcast, backcast_ref, atol=1e-5, rtol=1e-5)
    assert jnp.allclose(forecast, forecast_ref, atol=1e-5, rtol=1e-5)

    # Secondary check: medium batch -> multi-step "parallel" grid + ragged last tile.
    batch2 = 300
    x2 = jax.random.normal(k_x2, (batch2, input_size), dtype=jnp.float32)
    bc2, fc2 = nbeats_block_forward(x2, fused_params)
    jax.block_until_ready((bc2, fc2))
    bc2_ref, fc2_ref = reference_forward(x2, params)
    assert jnp.allclose(bc2, bc2_ref, atol=1e-5, rtol=1e-5)
    assert jnp.allclose(fc2, fc2_ref, atol=1e-5, rtol=1e-5)

    print("KERNEL_OK")
</pallas_src>

<mosaic_0001>
module attributes {stable_mosaic.version = 11 : i64} {
  func.func @nbeats_block_kernel(%arg0: i32, %arg1: memref<8x16xf32, #tpu.memory_space<vmem>>, %arg2: memref<16x32xf32, #tpu.memory_space<vmem>>, %arg3: memref<1x32xf32, #tpu.memory_space<vmem>>, %arg4: memref<32x32xf32, #tpu.memory_space<vmem>>, %arg5: memref<1x32xf32, #tpu.memory_space<vmem>>, %arg6: memref<32x32xf32, #tpu.memory_space<vmem>>, %arg7: memref<1x32xf32, #tpu.memory_space<vmem>>, %arg8: memref<32x16xf32, #tpu.memory_space<vmem>>, %arg9: memref<1x16xf32, #tpu.memory_space<vmem>>, %arg10: memref<32x8xf32, #tpu.memory_space<vmem>>, %arg11: memref<1x8xf32, #tpu.memory_space<vmem>>, %arg12: memref<8x16xf32, #tpu.memory_space<vmem>>, %arg13: memref<8x8xf32, #tpu.memory_space<vmem>>) attributes {dimension_semantics = [#tpu.dimension_semantics<parallel>], iteration_bounds = array<i64: 1>, scalar_prefetch = 0 : i64, scratch_operands = 0 : i64, tpu.core_type = #tpu.core_type<tc>, window_params = [{transform_indices = @transform_0, window_bounds = array<i64: 8, 16>}, {pipeline_mode = #tpu.pipeline_mode<synchronous>, transform_indices = @transform_1, window_bounds = array<i64: 16, 32>}, {pipeline_mode = #tpu.pipeline_mode<synchronous>, transform_indices = @transform_2, window_bounds = array<i64: 1, 32>}, {pipeline_mode = #tpu.pipeline_mode<synchronous>, transform_indices = @transform_3, window_bounds = array<i64: 32, 32>}, {pipeline_mode = #tpu.pipeline_mode<synchronous>, transform_indices = @transform_4, window_bounds = array<i64: 1, 32>}, {pipeline_mode = #tpu.pipeline_mode<synchronous>, transform_indices = @transform_5, window_bounds = array<i64: 32, 32>}, {pipeline_mode = #tpu.pipeline_mode<synchronous>, transform_indices = @transform_6, window_bounds = array<i64: 1, 32>}, {pipeline_mode = #tpu.pipeline_mode<synchronous>, transform_indices = @transform_7, window_bounds = array<i64: 32, 16>}, {pipeline_mode = #tpu.pipeline_mode<synchronous>, transform_indices = @transform_8, window_bounds = array<i64: 1, 16>}, {pipeline_mode = #tpu.pipeline_mode<synchronous>, transform_indices = @transform_9, window_bounds = array<i64: 32, 8>}, {pipeline_mode = #tpu.pipeline_mode<synchronous>, transform_indices = @transform_10, window_bounds = array<i64: 1, 8>}, {transform_indices = @transform_11, window_bounds = array<i64: 8, 16>}, {transform_indices = @transform_12, window_bounds = array<i64: 8, 8>}]} {
    %c0 = arith.constant 0 : index
    %c0_0 = arith.constant 0 : index
    %0 = vector.load %arg1[%c0, %c0_0] : memref<8x16xf32, #tpu.memory_space<vmem>>, vector<8x16xf32>
    %c0_1 = arith.constant 0 : index
    %c0_2 = arith.constant 0 : index
    %1 = vector.load %arg2[%c0_1, %c0_2] : memref<16x32xf32, #tpu.memory_space<vmem>>, vector<16x32xf32>
    %cst = arith.constant dense<0.000000e+00> : vector<8x32xf32>
    %2 = tpu.matmul %0, %1, %cst {dimension_numbers = #tpu.dot_dimension_numbers<[1], [0], [0], [1], [0, 0, 1, 1], [], []>} : vector<8x16xf32>, vector<16x32xf32>, vector<8x32xf32> -> vector<8x32xf32>
    %c0_3 = arith.constant 0 : index
    %c0_4 = arith.constant 0 : index
    %3 = vector.load %arg3[%c0_3, %c0_4] : memref<1x32xf32, #tpu.memory_space<vmem>>, vector<1x32xf32>
    %4 = vector.broadcast %3 : vector<1x32xf32> to vector<8x32xf32>
    %5 = arith.addf %2, %4 : vector<8x32xf32>
    %cst_5 = arith.constant 0.000000e+00 : f32
    %6 = vector.broadcast %cst_5 : f32 to vector<8x32xf32>
    %7 = arith.maximumf %5, %6 : vector<8x32xf32>
    %c0_6 = arith.constant 0 : index
    %c0_7 = arith.constant 0 : index
    %8 = vector.load %arg4[%c0_6, %c0_7] : memref<32x32xf32, #tpu.memory_space<vmem>>, vector<32x32xf32>
    %cst_8 = arith.constant dense<0.000000e+00> : vector<8x32xf32>
    %9 = tpu.matmul %7, %8, %cst_8 {dimension_numbers = #tpu.dot_dimension_numbers<[1], [0], [0], [1], [0, 0, 1, 1], [], []>} : vector<8x32xf32>, vector<32x32xf32>, vector<8x32xf32> -> vector<8x32xf32>
    %c0_9 = arith.constant 0 : index
    %c0_10 = arith.constant 0 : index
    %10 = vector.load %arg5[%c0_9, %c0_10] : memref<1x32xf32, #tpu.memory_space<vmem>>, vector<1x32xf32>
    %11 = vector.broadcast %10 : vector<1x32xf32> to vector<8x32xf32>
    %12 = arith.addf %9, %11 : vector<8x32xf32>
    %cst_11 = arith.constant 0.000000e+00 : f32
    %13 = vector.broadcast %cst_11 : f32 to vector<8x32xf32>
    %14 = arith.maximumf %12, %13 : vector<8x32xf32>
    %c0_12 = arith.constant 0 : index
    %c0_13 = arith.constant 0 : index
    %15 = vector.load %arg6[%c0_12, %c0_13] : memref<32x32xf32, #tpu.memory_space<vmem>>, vector<32x32xf32>
    %cst_14 = arith.constant dense<0.000000e+00> : vector<8x32xf32>
    %16 = tpu.matmul %14, %15, %cst_14 {dimension_numbers = #tpu.dot_dimension_numbers<[1], [0], [0], [1], [0, 0, 1, 1], [], []>} : vector<8x32xf32>, vector<32x32xf32>, vector<8x32xf32> -> vector<8x32xf32>
    %c0_15 = arith.constant 0 : index
    %c0_16 = arith.constant 0 : index
    %17 = vector.load %arg7[%c0_15, %c0_16] : memref<1x32xf32, #tpu.memory_space<vmem>>, vector<1x32xf32>
    %18 = vector.broadcast %17 : vector<1x32xf32> to vector<8x32xf32>
    %19 = arith.addf %16, %18 : vector<8x32xf32>
    %cst_17 = arith.constant 0.000000e+00 : f32
    %20 = vector.broadcast %cst_17 : f32 to vector<8x32xf32>
    %21 = arith.maximumf %19, %20 : vector<8x32xf32>
    %c0_18 = arith.constant 0 : index
    %c0_19 = arith.constant 0 : index
    %22 = vector.load %arg8[%c0_18, %c0_19] : memref<32x16xf32, #tpu.memory_space<vmem>>, vector<32x16xf32>
    %cst_20 = arith.constant dense<0.000000e+00> : vector<8x16xf32>
    %23 = tpu.matmul %21, %22, %cst_20 {dimension_numbers = #tpu.dot_dimension_numbers<[1], [0], [0], [1], [0, 0, 1, 1], [], []>} : vector<8x32xf32>, vector<32x16xf32>, vector<8x16xf32> -> vector<8x16xf32>
    %c0_21 = arith.constant 0 : index
    %c0_22 = arith.constant 0 : index
    %24 = vector.load %arg9[%c0_21, %c0_22] : memref<1x16xf32, #tpu.memory_space<vmem>>, vector<1x16xf32>
    %25 = vector.broadcast %24 : vector<1x16xf32> to vector<8x16xf32>
    %26 = arith.addf %23, %25 : vector<8x16xf32>
    %c0_23 = arith.constant 0 : index
    %c0_24 = arith.constant 0 : index
    %27 = vector.load %arg10[%c0_23, %c0_24] : memref<32x8xf32, #tpu.memory_space<vmem>>, vector<32x8xf32>
    %cst_25 = arith.constant dense<0.000000e+00> : vector<8x8xf32>
    %28 = tpu.matmul %21, %27, %cst_25 {dimension_numbers = #tpu.dot_dimension_numbers<[1], [0], [0], [1], [0, 0, 1, 1], [], []>} : vector<8x32xf32>, vector<32x8xf32>, vector<8x8xf32> -> vector<8x8xf32>
    %c0_26 = arith.constant 0 : index
    %c0_27 = arith.constant 0 : index
    %29 = vector.load %arg11[%c0_26, %c0_27] : memref<1x8xf32, #tpu.memory_space<vmem>>, vector<1x8xf32>
    %30 = vector.broadcast %29 : vector<1x8xf32> to vector<8x8xf32>
    %31 = arith.addf %28, %30 : vector<8x8xf32>
    %c0_28 = arith.constant 0 : index
    %c0_29 = arith.constant 0 : index
    %32 = vector.load %arg12[%c0_28, %c0_29] : memref<8x16xf32, #tpu.memory_space<vmem>>, vector<8x16xf32>
    tpu.vector_store %arg12[%c0_28, %c0_29], %26 {strides = array<i32>} : memref<8x16xf32, #tpu.memory_space<vmem>>, vector<8x16xf32>,
    %c0_30 = arith.constant 0 : index
    %c0_31 = arith.constant 0 : index
    %33 = vector.load %arg13[%c0_30, %c0_31] : memref<8x8xf32, #tpu.memory_space<vmem>>, vector<8x8xf32>
    tpu.vector_store %arg13[%c0_30, %c0_31], %31 {strides = array<i32>} : memref<8x8xf32, #tpu.memory_space<vmem>>, vector<8x8xf32>,
    return
  }
  func.func @transform_0(%arg0: i32) -> (i32, i32) {
    %c0_i32 = arith.constant 0 : i32
    %c0_i32_0 = arith.constant 0 : i32
    return %arg0, %c0_i32 : i32, i32
  }
  func.func @transform_1(%arg0: i32) -> (i32, i32) {
    %c0_i32 = arith.constant 0 : i32
    %c0_i32_0 = arith.constant 0 : i32
    %c0_i32_1 = arith.constant 0 : i32
    return %c0_i32, %c0_i32_0 : i32, i32
  }
  func.func @transform_2(%arg0: i32) -> (i32, i32) {
    %c0_i32 = arith.constant 0 : i32
    %c0_i32_0 = arith.constant 0 : i32
    %c0_i32_1 = arith.constant 0 : i32
    return %c0_i32, %c0_i32_0 : i32, i32
  }
  func.func @transform_3(%arg0: i32) -> (i32, i32) {
    %c0_i32 = arith.constant 0 : i32
    %c0_i32_0 = arith.constant 0 : i32
    %c0_i32_1 = arith.constant 0 : i32
    return %c0_i32, %c0_i32_0 : i32, i32
  }
  func.func @transform_4(%arg0: i32) -> (i32, i32) {
    %c0_i32 = arith.constant 0 : i32
    %c0_i32_0 = arith.constant 0 : i32
    %c0_i32_1 = arith.constant 0 : i32
    return %c0_i32, %c0_i32_0 : i32, i32
  }
  func.func @transform_5(%arg0: i32) -> (i32, i32) {
    %c0_i32 = arith.constant 0 : i32
    %c0_i32_0 = arith.constant 0 : i32
    %c0_i32_1 = arith.constant 0 : i32
    return %c0_i32, %c0_i32_0 : i32, i32
  }
  func.func @transform_6(%arg0: i32) -> (i32, i32) {
    %c0_i32 = arith.constant 0 : i32
    %c0_i32_0 = arith.constant 0 : i32
    %c0_i32_1 = arith.constant 0 : i32
    return %c0_i32, %c0_i32_0 : i32, i32
  }
  func.func @transform_7(%arg0: i32) -> (i32, i32) {
    %c0_i32 = arith.constant 0 : i32
    %c0_i32_0 = arith.constant 0 : i32
    %c0_i32_1 = arith.constant 0 : i32
    return %c0_i32, %c0_i32_0 : i32, i32
  }
  func.func @transform_8(%arg0: i32) -> (i32, i32) {
    %c0_i32 = arith.constant 0 : i32
    %c0_i32_0 = arith.constant 0 : i32
    %c0_i32_1 = arith.constant 0 : i32
    return %c0_i32, %c0_i32_0 : i32, i32
  }
  func.func @transform_9(%arg0: i32) -> (i32, i32) {
    %c0_i32 = arith.constant 0 : i32
    %c0_i32_0 = arith.constant 0 : i32
    %c0_i32_1 = arith.constant 0 : i32
    return %c0_i32, %c0_i32_0 : i32, i32
  }
  func.func @transform_10(%arg0: i32) -> (i32, i32) {
    %c0_i32 = arith.constant 0 : i32
    %c0_i32_0 = arith.constant 0 : i32
    %c0_i32_1 = arith.constant 0 : i32
    return %c0_i32, %c0_i32_0 : i32, i32
  }
  func.func @transform_11(%arg0: i32) -> (i32, i32) {
    %c0_i32 = arith.constant 0 : i32
    %c0_i32_0 = arith.constant 0 : i32
    return %arg0, %c0_i32 : i32, i32
  }
  func.func @transform_12(%arg0: i32) -> (i32, i32) {
    %c0_i32 = arith.constant 0 : i32
    %c0_i32_0 = arith.constant 0 : i32
    return %arg0, %c0_i32 : i32, i32
  }
}

</mosaic_0001>

<llo_original>
// kernel: tpu_custom_call.1
$region0: #{tpu_custom_call.1}
  #allocation0 [shape = 'u32[]', space=smem, size = 0x4, offset = 0x4, fixed_abs, tag = 'smem constant byte address 0x4 - core index']
  #allocation1 [shape = 'u32[144,128]{1,0:T(1,128)}', space=vmem, size = 0x12000, scoped, tag = 'internal scratch']
  %s0 = inlined_call_operand.hbm [shape: f32[4,16], index: 0, kind: input, shape index: {}]
  %s1 = inlined_call_operand.vmem [shape: f32[16,32], index: 1, kind: input, shape index: {}]
  %s2 = inlined_call_operand.vmem [shape: f32[1,32], index: 2, kind: input, shape index: {}]
  %s3 = inlined_call_operand.vmem [shape: f32[32,32], index: 3, kind: input, shape index: {}]
  %s4 = inlined_call_operand.vmem [shape: f32[1,32], index: 4, kind: input, shape index: {}]
  %s5 = inlined_call_operand.vmem [shape: f32[32,32], index: 5, kind: input, shape index: {}]
  %s6 = inlined_call_operand.vmem [shape: f32[1,32], index: 6, kind: input, shape index: {}]
  %s7 = inlined_call_operand.vmem [shape: f32[32,16], index: 7, kind: input, shape index: {}]
  %s8 = inlined_call_operand.vmem [shape: f32[1,16], index: 8, kind: input, shape index: {}]
  %s9 = inlined_call_operand.vmem [shape: f32[32,8], index: 9, kind: input, shape index: {}]
  %s10 = inlined_call_operand.vmem [shape: f32[1,8], index: 10, kind: input, shape index: {}]
  %s11 = inlined_call_operand.hbm [shape: f32[4,16], index: 11, kind: output, shape index: {0}]
  %s12 = inlined_call_operand.hbm [shape: f32[4,8], index: 12, kind: output, shape index: {1}]
  %13 = xla_tuple %s11, %s12
  %s14 = sld [smem:[#allocation0]]
  $region66: #{tpu_custom_call.1} parent=0
    _
  %s16 = ssub.s32 1, %s14
  %s17 = scalar_select 0, %s16, %s14
  $region1: #{tpu_custom_call.1} parent=0
    #allocation2 [shape = 'u8[4096]{0}', space=vmem, size = 0x1000, scoped, tag = 'input window, operand 0, single buffered']
    #allocation3 [shape = 's32[1]{0}', space=sflag, size = 0x4, scoped, tag = 'scoped memory for tpu_custom_call.1']
    #allocation4 [shape = 's32[1]{0}', space=sflag, size = 0x4, scoped, tag = 'scoped memory for tpu_custom_call.1']
    #allocation5 [shape = 'u8[4096]{0}', space=vmem, size = 0x1000, scoped, tag = 'output window, operand 0, single buffered']
    #allocation6 [shape = 'u8[4096]{0}', space=vmem, size = 0x1000, scoped, tag = 'output window, operand 1, single buffered']
    #allocation7 [shape = 's32[1]{0}', space=sflag, size = 0x4, scoped, tag = 'scoped memory for tpu_custom_call.1']
    %18 = vsyncpa [#allocation3], 0
    %19 = vsyncpa [#allocation4], 0
    %20 = vsyncpa [#allocation7], 0
    // Predicated region
    $region2: #{tpu_custom_call.1} parent=1 // pred_check
      _
    $region3: #{tpu_custom_call.1} parent=1 // pred_check_branch
      %22 = sbr.rel (0) target = $region5
    $region4: #{tpu_custom_call.1} parent=1 // pred_region
      %s24 = ssub.s32 128, 64
      %25 = vsyncadd [#allocation3], %s24
      %s26 = sshll.u32 [#allocation2], 4
      %s27 = int_to_ptr.vmem [resolvable:$true] %s26
      %32 = dma.hbm_to_vmem [thread:$0]  %s0, 64, %s27, [#allocation3], 64, 64, 4
    $region5: #{tpu_custom_call.1} parent=1 // pred_fallthru
      _
    // Predicated region
    $region6: #{tpu_custom_call.1} parent=1 // pred_check
      _
    $region7: #{tpu_custom_call.1} parent=1 // pred_check_branch
      %34 = sbr.rel (0) target = $region9
    $region8: #{tpu_custom_call.1} parent=1 // pred_region
      _
    $region9: #{tpu_custom_call.1} parent=1 // pred_fallthru
      _
    // Predicated region
    $region10: #{tpu_custom_call.1} parent=1 // pred_check
      _
    $region11: #{tpu_custom_call.1} parent=1 // pred_check_branch
      %36 = sbr.rel (0) target = $region13
    $region12: #{tpu_custom_call.1} parent=1 // pred_region
      _
    $region13: #{tpu_custom_call.1} parent=1 // pred_fallthru
      _
    // Predicated region
    $region14: #{tpu_custom_call.1} parent=1 // pred_check
      _
    $region15: #{tpu_custom_call.1} parent=1 // pred_check_branch
      %38 = sbr.rel (0) target = $region17
    $region16: #{tpu_custom_call.1} parent=1 // pred_region
      _
    $region17: #{tpu_custom_call.1} parent=1 // pred_fallthru
      _
    // Predicated region
    $region18: #{tpu_custom_call.1} parent=1 // pred_check
      _
    $region19: #{tpu_custom_call.1} parent=1 // pred_check_branch
      %40 = sbr.rel (0) target = $region21
    $region20: #{tpu_custom_call.1} parent=1 // pred_region
      _
    $region21: #{tpu_custom_call.1} parent=1 // pred_fallthru
      _
    // Predicated region
    $region22: #{tpu_custom_call.1} parent=1 // pred_check
      _
    $region23: #{tpu_custom_call.1} parent=1 // pred_check_branch
      %42 = sbr.rel (0) target = $region25
    $region24: #{tpu_custom_call.1} parent=1 // pred_region
      _
    $region25: #{tpu_custom_call.1} parent=1 // pred_fallthru
      _
    // Predicated region
    $region26: #{tpu_custom_call.1} parent=1 // pred_check
      _
    $region27: #{tpu_custom_call.1} parent=1 // pred_check_branch
      %44 = sbr.rel (0) target = $region29
    $region28: #{tpu_custom_call.1} parent=1 // pred_region
      _
    $region29: #{tpu_custom_call.1} parent=1 // pred_fallthru
      _
    // Predicated region
    $region30: #{tpu_custom_call.1} parent=1 // pred_check
      _
    $region31: #{tpu_custom_call.1} parent=1 // pred_check_branch
      %46 = sbr.rel (0) target = $region33
    $region32: #{tpu_custom_call.1} parent=1 // pred_region
      _
    $region33: #{tpu_custom_call.1} parent=1 // pred_fallthru
      _
    // Predicated region
    $region34: #{tpu_custom_call.1} parent=1 // pred_check
      _
    $region35: #{tpu_custom_call.1} parent=1 // pred_check_branch
      %48 = sbr.rel (0) target = $region37
    $region36: #{tpu_custom_call.1} parent=1 // pred_region
      _
    $region37: #{tpu_custom_call.1} parent=1 // pred_fallthru
      _
    // Predicated region
    $region38: #{tpu_custom_call.1} parent=1 // pred_check
      _
    $region39: #{tpu_custom_call.1} parent=1 // pred_check_branch
      %50 = sbr.rel (0) target = $region41
    $region40: #{tpu_custom_call.1} parent=1 // pred_region
      _
    $region41: #{tpu_custom_call.1} parent=1 // pred_fallthru
      _
    // Predicated region
    $region42: #{tpu_custom_call.1} parent=1 // pred_check
      _
    $region43: #{tpu_custom_call.1} parent=1 // pred_check_branch
      %52 = sbr.rel (0) target = $region45
    $region44: #{tpu_custom_call.1} parent=1 // pred_region
      _
    $region45: #{tpu_custom_call.1} parent=1 // pred_fallthru
      _
    // Predicated region
    $region46: #{tpu_custom_call.1} parent=1 // pred_check
      _
    $region47: #{tpu_custom_call.1} parent=1 // pred_check_branch
      %54 = sbr.rel (0) target = $region49
    $region48: #{tpu_custom_call.1} parent=1 // pred_region
      %55 = dma.done [#allocation3], 128
    $region49: #{tpu_custom_call.1} parent=1 // pred_fallthru
      _
    %v56 = vld [vmem:[#allocation2] sm:$0xff]
    %v57 = vld [vmem:[%s1] sm:$0xff]
    %v58 = vld [vmem:[%s1 + $0x8] sm:$0xff]
    %v59 = vld [vmem:[%s2] sm:$0x1]
    %v61 = vlaneseq
    %v62 = vshrl.u32 %v61, 7
    %v63 = vsub.s32 0, %v62
    %v64 = vrot.slane %v59, %v63
    %vm66 = vcmask 130048
    %v68 = vsel %vm66, %v56, 0
    %70 = vmatprep.subr.mxu0 0.0
    %71 = vmatpush1.msra.mxu0 %v57
    %72 = vmatprep.subr.mxu0 0.0
    %73 = vmatpush1.msra.mxu0 %v58
    %74 = vmatprep.subr.mxu0 0.0
    %75 = vmatpush1.msra.mxu0 0.0
    %76 = vmatprep.subr.mxu0 0.0
    %77 = vmatpush1.msra.mxu0 0.0
    %78 = vmatprep.subr.mxu0 0.0
    %79 = vmatpush1.msra.mxu0 0.0
    %80 = vmatprep.subr.mxu0 0.0
    %81 = vmatpush1.msra.mxu0 0.0
    %82 = vmatprep.subr.mxu0 0.0
    %83 = vmatpush1.msra.mxu0 0.0
    %84 = vmatprep.subr.mxu0 0.0
    %85 = vmatpush1.msra.mxu0 0.0
    %86 = vmatprep.subr.mxu0 0.0
    %87 = vmatpush1.msra.mxu0 0.0
    %88 = vmatprep.subr.mxu0 0.0
    %89 = vmatpush1.msra.mxu0 0.0
    %90 = vmatprep.subr.mxu0 0.0
    %91 = vmatpush1.msra.mxu0 0.0
    %92 = vmatprep.subr.mxu0 0.0
    %93 = vmatpush1.msra.mxu0 0.0
    %94 = vmatprep.subr.mxu0 0.0
    %95 = vmatpush1.msra.mxu0 0.0
    %96 = vmatprep.subr.mxu0 0.0
    %97 = vmatpush1.msra.mxu0 0.0
    %98 = vmatprep.subr.mxu0 0.0
    %99 = vmatpush1.msra.mxu0 0.0
    %100 = vmatprep.subr.mxu0 0.0
    %101 = vmatpush1.msra.mxu0 0.0
    %102 = vmatprep.subr.mxu0 0.0
    %103 = vmatpush1.msra.mxu0 0.0
    %104 = vmatprep.subr.mxu0 0.0
    %105 = vmatpush1.msra.mxu0 0.0
    %106 = vmatprep.subr.mxu0 0.0
    %107 = vmatpush1.msra.mxu0 0.0
    %108 = vmatprep.subr.mxu0 0.0
    %109 = vmatpush1.msra.mxu0 0.0
    %110 = vmatprep.subr.mxu0 0.0
    %111 = vmatpush1.msra.mxu0 0.0
    %112 = vmatprep.subr.mxu0 0.0
    %113 = vmatpush1.msra.mxu0 0.0
    %114 = vmatprep.subr.mxu0 0.0
    %115 = vmatpush1.msra.mxu0 0.0
    %116 = vmatprep.subr.mxu0 0.0
    %117 = vmatpush1.msra.mxu0 0.0
    %118 = vmatprep.subr.mxu0 0.0
    %119 = vmatpush1.msra.mxu0 0.0
    %120 = vmatprep.subr.mxu0 0.0
    %121 = vmatpush1.msra.mxu0 0.0
    %122 = vmatprep.subr.mxu0 0.0
    %123 = vmatpush1.msra.mxu0 0.0
    %124 = vmatprep.subr.mxu0 0.0
    %125 = vmatpush1.msra.mxu0 0.0
    %126 = vmatprep.subr.mxu0 0.0
    %127 = vmatpush1.msra.mxu0 0.0
    %128 = vmatprep.subr.mxu0 0.0
    %129 = vmatpush1.msra.mxu0 0.0
    %130 = vmatprep.subr.mxu0 0.0
    %131 = vmatpush1.msra.mxu0 0.0
    %132 = vmatprep.subr.mxu0 0.0
    %133 = vmatpush1.msra.mxu0 0.0
    %134 = vmatprep.mubr.f32.mxu0 0.0
    %135 = vmatmul.mubr.f32.gmra.mrb[0].mxu0 %v68
    %v136 = vpop.f32.mrb[0].mxu0
    %v137 = vadd.f32 %v64, %v136
    %v138 = vpop.f32.mrb[0].mxu0
    %139 = vdwg.mxu0
    %v140 = vmax.f32 %v137, 0.0
    %v141 = vld [vmem:[%s3] sm:$0xff]
    %v142 = vld [vmem:[%s3 + $0x8] sm:$0xff]
    %v143 = vld [vmem:[%s3 + $0x10] sm:$0xff]
    %v144 = vld [vmem:[%s3 + $0x18] sm:$0xff]
    %v145 = vld [vmem:[%s4] sm:$0x1]
    %v147 = vlaneseq
    %v148 = vshrl.u32 %v147, 7
    %v149 = vsub.s32 0, %v148
    %v150 = vrot.slane %v145, %v149
    %vm152 = vcmask 261120
    %v154 = vsel %vm152, %v140, 0
    %156 = vmatprep.subr.mxu0 0.0
    %157 = vmatpush1.msra.mxu0 %v141
    %158 = vmatprep.subr.mxu0 0.0
    %159 = vmatpush1.msra.mxu0 %v142
    %160 = vmatprep.subr.mxu0 0.0
    %161 = vmatpush1.msra.mxu0 %v143
    %162 = vmatprep.subr.mxu0 0.0
    %163 = vmatpush1.msra.mxu0 %v144
    %164 = vmatprep.subr.mxu0 0.0
    %165 = vmatpush1.msra.mxu0 0.0
    %166 = vmatprep.subr.mxu0 0.0
    %167 = vmatpush1.msra.mxu0 0.0
    %168 = vmatprep.subr.mxu0 0.0
    %169 = vmatpush1.msra.mxu0 0.0
    %170 = vmatprep.subr.mxu0 0.0
    %171 = vmatpush1.msra.mxu0 0.0
    %172 = vmatprep.subr.mxu0 0.0
    %173 = vmatpush1.msra.mxu0 0.0
    %174 = vmatprep.subr.mxu0 0.0
    %175 = vmatpush1.msra.mxu0 0.0
    %176 = vmatprep.subr.mxu0 0.0
    %177 = vmatpush1.msra.mxu0 0.0
    %178 = vmatprep.subr.mxu0 0.0
    %179 = vmatpush1.msra.mxu0 0.0
    %180 = vmatprep.subr.mxu0 0.0
    %181 = vmatpush1.msra.mxu0 0.0
    %182 = vmatprep.subr.mxu0 0.0
    %183 = vmatpush1.msra.mxu0 0.0
    %184 = vmatprep.subr.mxu0 0.0
    %185 = vmatpush1.msra.mxu0 0.0
    %186 = vmatprep.subr.mxu0 0.0
    %187 = vmatpush1.msra.mxu0 0.0
    %188 = vmatprep.subr.mxu0 0.0
    %189 = vmatpush1.msra.mxu0 0.0
    %190 = vmatprep.subr.mxu0 0.0
    %191 = vmatpush1.msra.mxu0 0.0
    %192 = vmatprep.subr.mxu0 0.0
    %193 = vmatpush1.msra.mxu0 0.0
    %194 = vmatprep.subr.mxu0 0.0
    %195 = vmatpush1.msra.mxu0 0.0
    %196 = vmatprep.subr.mxu0 0.0
    %197 = vmatpush1.msra.mxu0 0.0
    %198 = vmatprep.subr.mxu0 0.0
    %199 = vmatpush1.msra.mxu0 0.0
    %200 = vmatprep.subr.mxu0 0.0
    %201 = vmatpush1.msra.mxu0 0.0
    %202 = vmatprep.subr.mxu0 0.0
    %203 = vmatpush1.msra.mxu0 0.0
    %204 = vmatprep.subr.mxu0 0.0
    %205 = vmatpush1.msra.mxu0 0.0
    %206 = vmatprep.subr.mxu0 0.0
    %207 = vmatpush1.msra.mxu0 0.0
    %208 = vmatprep.subr.mxu0 0.0
    %209 = vmatpush1.msra.mxu0 0.0
    %210 = vmatprep.subr.mxu0 0.0
    %211 = vmatpush1.msra.mxu0 0.0
    %212 = vmatprep.subr.mxu0 0.0
    %213 = vmatpush1.msra.mxu0 0.0
    %214 = vmatprep.subr.mxu0 0.0
    %215 = vmatpush1.msra.mxu0 0.0
    %216 = vmatprep.subr.mxu0 0.0
    %217 = vmatpush1.msra.mxu0 0.0
    %218 = vmatprep.subr.mxu0 0.0
    %219 = vmatpush1.msra.mxu0 0.0
    %220 = vmatprep.mubr.f32.mxu0 0.0
    %221 = vmatmul.mubr.f32.gmra.mrb[0].mxu0 %v154
    %v222 = vpop.f32.mrb[0].mxu0
    %v223 = vadd.f32 %v150, %v222
    %v224 = vpop.f32.mrb[0].mxu0
    %225 = vdwg.mxu0
    %v226 = vmax.f32 %v223, 0.0
    %v227 = vld [vmem:[%s5] sm:$0xff]
    %v228 = vld [vmem:[%s5 + $0x8] sm:$0xff]
    %v229 = vld [vmem:[%s5 + $0x10] sm:$0xff]
    %v230 = vld [vmem:[%s5 + $0x18] sm:$0xff]
    %v231 = vld [vmem:[%s6] sm:$0x1]
    %v233 = vlaneseq
    %v234 = vshrl.u32 %v233, 7
    %v235 = vsub.s32 0, %v234
    %v236 = vrot.slane %v231, %v235
    %v239 = vsel %vm152, %v226, 0
    %241 = vmatprep.subr.mxu0 0.0
    %242 = vmatpush1.msra.mxu0 %v227
    %243 = vmatprep.subr.mxu0 0.0
    %244 = vmatpush1.msra.mxu0 %v228
    %245 = vmatprep.subr.mxu0 0.0
    %246 = vmatpush1.msra.mxu0 %v229
    %247 = vmatprep.subr.mxu0 0.0
    %248 = vmatpush1.msra.mxu0 %v230
    %249 = vmatprep.subr.mxu0 0.0
    %250 = vmatpush1.msra.mxu0 0.0
    %251 = vmatprep.subr.mxu0 0.0
    %252 = vmatpush1.msra.mxu0 0.0
    %253 = vmatprep.subr.mxu0 0.0
    %254 = vmatpush1.msra.mxu0 0.0
    %255 = vmatprep.subr.mxu0 0.0
    %256 = vmatpush1.msra.mxu0 0.0
    %257 = vmatprep.subr.mxu0 0.0
    %258 = vmatpush1.msra.mxu0 0.0
    %259 = vmatprep.subr.mxu0 0.0
    %260 = vmatpush1.msra.mxu0 0.0
    %261 = vmatprep.subr.mxu0 0.0
    %262 = vmatpush1.msra.mxu0 0.0
    %263 = vmatprep.subr.mxu0 0.0
    %264 = vmatpush1.msra.mxu0 0.0
    %265 = vmatprep.subr.mxu0 0.0
    %266 = vmatpush1.msra.mxu0 0.0
    %267 = vmatprep.subr.mxu0 0.0
    %268 = vmatpush1.msra.mxu0 0.0
    %269 = vmatprep.subr.mxu0 0.0
    %270 = vmatpush1.msra.mxu0 0.0
    %271 = vmatprep.subr.mxu0 0.0
    %272 = vmatpush1.msra.mxu0 0.0
    %273 = vmatprep.subr.mxu0 0.0
    %274 = vmatpush1.msra.mxu0 0.0
    %275 = vmatprep.subr.mxu0 0.0
    %276 = vmatpush1.msra.mxu0 0.0
    %277 = vmatprep.subr.mxu0 0.0
    %278 = vmatpush1.msra.mxu0 0.0
    %279 = vmatprep.subr.mxu0 0.0
    %280 = vmatpush1.msra.mxu0 0.0
    %281 = vmatprep.subr.mxu0 0.0
    %282 = vmatpush1.msra.mxu0 0.0
    %283 = vmatprep.subr.mxu0 0.0
    %284 = vmatpush1.msra.mxu0 0.0
    %285 = vmatprep.subr.mxu0 0.0
    %286 = vmatpush1.msra.mxu0 0.0
    %287 = vmatprep.subr.mxu0 0.0
    %288 = vmatpush1.msra.mxu0 0.0
    %289 = vmatprep.subr.mxu0 0.0
    %290 = vmatpush1.msra.mxu0 0.0
    %291 = vmatprep.subr.mxu0 0.0
    %292 = vmatpush1.msra.mxu0 0.0
    %293 = vmatprep.subr.mxu0 0.0
    %294 = vmatpush1.msra.mxu0 0.0
    %295 = vmatprep.subr.mxu0 0.0
    %296 = vmatpush1.msra.mxu0 0.0
    %297 = vmatprep.subr.mxu0 0.0
    %298 = vmatpush1.msra.mxu0 0.0
    %299 = vmatprep.subr.mxu0 0.0
    %300 = vmatpush1.msra.mxu0 0.0
    %301 = vmatprep.subr.mxu0 0.0
    %302 = vmatpush1.msra.mxu0 0.0
    %303 = vmatprep.subr.mxu0 0.0
    %304 = vmatpush1.msra.mxu0 0.0
    %305 = vmatprep.mubr.f32.mxu0 0.0
    %306 = vmatmul.mubr.f32.gmra.mrb[0].mxu0 %v239
    %v307 = vpop.f32.mrb[0].mxu0
    %v308 = vadd.f32 %v236, %v307
    %v309 = vpop.f32.mrb[0].mxu0
    %310 = vdwg.mxu0
    %v311 = vmax.f32 %v308, 0.0
    %v312 = vld [vmem:[%s7] sm:$0xff]
    %v313 = vld [vmem:[%s7 + $0x8] sm:$0xff]
    %v314 = vld [vmem:[%s7 + $0x10] sm:$0xff]
    %v315 = vld [vmem:[%s7 + $0x18] sm:$0xff]
    %v316 = vld [vmem:[%s8] sm:$0x1]
    %v318 = vlaneseq
    %v319 = vshrl.u32 %v318, 7
    %v320 = vsub.s32 0, %v319
    %v321 = vrot.slane %v316, %v320
    %v324 = vsel %vm152, %v311, 0
    %326 = vmatprep.subr.mxu0 0.0
    %327 = vmatpush1.msra.mxu0 %v312
    %328 = vmatprep.subr.mxu0 0.0
    %329 = vmatpush1.msra.mxu0 %v313
    %330 = vmatprep.subr.mxu0 0.0
    %331 = vmatpush1.msra.mxu0 %v314
    %332 = vmatprep.subr.mxu0 0.0
    %333 = vmatpush1.msra.mxu0 %v315
    %334 = vmatprep.subr.mxu0 0.0
    %335 = vmatpush1.msra.mxu0 0.0
    %336 = vmatprep.subr.mxu0 0.0
    %337 = vmatpush1.msra.mxu0 0.0
    %338 = vmatprep.subr.mxu0 0.0
    %339 = vmatpush1.msra.mxu0 0.0
    %340 = vmatprep.subr.mxu0 0.0
    %341 = vmatpush1.msra.mxu0 0.0
    %342 = vmatprep.subr.mxu0 0.0
    %343 = vmatpush1.msra.mxu0 0.0
    %344 = vmatprep.subr.mxu0 0.0
    %345 = vmatpush1.msra.mxu0 0.0
    %346 = vmatprep.subr.mxu0 0.0
    %347 = vmatpush1.msra.mxu0 0.0
    %348 = vmatprep.subr.mxu0 0.0
    %349 = vmatpush1.msra.mxu0 0.0
    %350 = vmatprep.subr.mxu0 0.0
    %351 = vmatpush1.msra.mxu0 0.0
    %352 = vmatprep.subr.mxu0 0.0
    %353 = vmatpush1.msra.mxu0 0.0
    %354 = vmatprep.subr.mxu0 0.0
    %355 = vmatpush1.msra.mxu0 0.0
    %356 = vmatprep.subr.mxu0 0.0
    %357 = vmatpush1.msra.mxu0 0.0
    %358 = vmatprep.subr.mxu0 0.0
    %359 = vmatpush1.msra.mxu0 0.0
    %360 = vmatprep.subr.mxu0 0.0
    %361 = vmatpush1.msra.mxu0 0.0
    %362 = vmatprep.subr.mxu0 0.0
    %363 = vmatpush1.msra.mxu0 0.0
    %364 = vmatprep.subr.mxu0 0.0
    %365 = vmatpush1.msra.mxu0 0.0
    %366 = vmatprep.subr.mxu0 0.0
    %367 = vmatpush1.msra.mxu0 0.0
    %368 = vmatprep.subr.mxu0 0.0
    %369 = vmatpush1.msra.mxu0 0.0
    %370 = vmatprep.subr.mxu0 0.0
    %371 = vmatpush1.msra.mxu0 0.0
    %372 = vmatprep.subr.mxu0 0.0
    %373 = vmatpush1.msra.mxu0 0.0
    %374 = vmatprep.subr.mxu0 0.0
    %375 = vmatpush1.msra.mxu0 0.0
    %376 = vmatprep.subr.mxu0 0.0
    %377 = vmatpush1.msra.mxu0 0.0
    %378 = vmatprep.subr.mxu0 0.0
    %379 = vmatpush1.msra.mxu0 0.0
    %380 = vmatprep.subr.mxu0 0.0
    %381 = vmatpush1.msra.mxu0 0.0
    %382 = vmatprep.subr.mxu0 0.0
    %383 = vmatpush1.msra.mxu0 0.0
    %384 = vmatprep.subr.mxu0 0.0
    %385 = vmatpush1.msra.mxu0 0.0
    %386 = vmatprep.subr.mxu0 0.0
    %387 = vmatpush1.msra.mxu0 0.0
    %388 = vmatprep.subr.mxu0 0.0
    %389 = vmatpush1.msra.mxu0 0.0
    %390 = vmatprep.mubr.f32.mxu0 0.0
    %391 = vmatmul.mubr.f32.gmra.mrb[0].mxu0 %v324
    %v392 = vpop.f32.mrb[0].mxu0
    %v393 = vadd.f32 %v321, %v392
    %v394 = vpop.f32.mrb[0].mxu0
    %395 = vdwg.mxu0
    %v396 = vld [vmem:[%s9] sm:$0xff]
    %v397 = vld [vmem:[%s9 + $0x8] sm:$0xff]
    %v398 = vld [vmem:[%s9 + $0x10] sm:$0xff]
    %v399 = vld [vmem:[%s9 + $0x18] sm:$0xff]
    %v400 = vld [vmem:[%s10] sm:$0x1]
    %v402 = vlaneseq
    %v403 = vshrl.u32 %v402, 7
    %v404 = vsub.s32 0, %v403
    %v405 = vrot.slane %v400, %v404
    %407 = vmatprep.subr.mxu0 0.0
    %408 = vmatpush1.msra.mxu0 %v396
    %409 = vmatprep.subr.mxu0 0.0
    %410 = vmatpush1.msra.mxu0 %v397
    %411 = vmatprep.subr.mxu0 0.0
    %412 = vmatpush1.msra.mxu0 %v398
    %413 = vmatprep.subr.mxu0 0.0
    %414 = vmatpush1.msra.mxu0 %v399
    %415 = vmatprep.subr.mxu0 0.0
    %416 = vmatpush1.msra.mxu0 0.0
    %417 = vmatprep.subr.mxu0 0.0
    %418 = vmatpush1.msra.mxu0 0.0
    %419 = vmatprep.subr.mxu0 0.0
    %420 = vmatpush1.msra.mxu0 0.0
    %421 = vmatprep.subr.mxu0 0.0
    %422 = vmatpush1.msra.mxu0 0.0
    %423 = vmatprep.subr.mxu0 0.0
    %424 = vmatpush1.msra.mxu0 0.0
    %425 = vmatprep.subr.mxu0 0.0
    %426 = vmatpush1.msra.mxu0 0.0
    %427 = vmatprep.subr.mxu0 0.0
    %428 = vmatpush1.msra.mxu0 0.0
    %429 = vmatprep.subr.mxu0 0.0
    %430 = vmatpush1.msra.mxu0 0.0
    %431 = vmatprep.subr.mxu0 0.0
    %432 = vmatpush1.msra.mxu0 0.0
    %433 = vmatprep.subr.mxu0 0.0
    %434 = vmatpush1.msra.mxu0 0.0
    %435 = vmatprep.subr.mxu0 0.0
    %436 = vmatpush1.msra.mxu0 0.0
    %437 = vmatprep.subr.mxu0 0.0
    %438 = vmatpush1.msra.mxu0 0.0
    %439 = vmatprep.subr.mxu0 0.0
    %440 = vmatpush1.msra.mxu0 0.0
    %441 = vmatprep.subr.mxu0 0.0
    %442 = vmatpush1.msra.mxu0 0.0
    %443 = vmatprep.subr.mxu0 0.0
    %444 = vmatpush1.msra.mxu0 0.0
    %445 = vmatprep.subr.mxu0 0.0
    %446 = vmatpush1.msra.mxu0 0.0
    %447 = vmatprep.subr.mxu0 0.0
    %448 = vmatpush1.msra.mxu0 0.0
    %449 = vmatprep.subr.mxu0 0.0
    %450 = vmatpush1.msra.mxu0 0.0
    %451 = vmatprep.subr.mxu0 0.0
    %452 = vmatpush1.msra.mxu0 0.0
    %453 = vmatprep.subr.mxu0 0.0
    %454 = vmatpush1.msra.mxu0 0.0
    %455 = vmatprep.subr.mxu0 0.0
    %456 = vmatpush1.msra.mxu0 0.0
    %457 = vmatprep.subr.mxu0 0.0
    %458 = vmatpush1.msra.mxu0 0.0
    %459 = vmatprep.subr.mxu0 0.0
    %460 = vmatpush1.msra.mxu0 0.0
    %461 = vmatprep.subr.mxu0 0.0
    %462 = vmatpush1.msra.mxu0 0.0
    %463 = vmatprep.subr.mxu0 0.0
    %464 = vmatpush1.msra.mxu0 0.0
    %465 = vmatprep.subr.mxu0 0.0
    %466 = vmatpush1.msra.mxu0 0.0
    %467 = vmatprep.subr.mxu0 0.0
    %468 = vmatpush1.msra.mxu0 0.0
    %469 = vmatprep.subr.mxu0 0.0
    %470 = vmatpush1.msra.mxu0 0.0
    %471 = vmatprep.mubr.f32.mxu0 0.0
    %472 = vmatmul.mubr.f32.gmra.mrb[0].mxu0 %v324
    %v473 = vpop.f32.mrb[0].mxu0
    %v474 = vadd.f32 %v405, %v473
    %v475 = vpop.f32.mrb[0].mxu0
    %476 = vdwg.mxu0
    %477 = vst.msk [vmem:[#allocation5] sm:$0xff] %vm66, %v393
    %vm478 = vcmask 64512
    %479 = vst.msk [vmem:[#allocation6] sm:$0xff] %vm478, %v474
    // Predicated region
    $region50: #{tpu_custom_call.1} parent=1 // pred_check
      _
    $region51: #{tpu_custom_call.1} parent=1 // pred_check_branch
      %481 = sbr.rel (0) target = $region53
    $region52: #{tpu_custom_call.1} parent=1 // pred_region
      %s483 = ssub.s32 128, 64
      %484 = vsyncadd [#allocation4], %s483
      %s485 = sshll.u32 [#allocation5], 4
      %s486 = int_to_ptr.vmem [resolvable:$true] %s485
      %491 = dma.vmem_to_hbm [thread:$0]  %s486, 64, %s11, [#allocation4], 64, 64, 4
    $region53: #{tpu_custom_call.1} parent=1 // pred_fallthru
      _
    // Predicated region
    $region54: #{tpu_custom_call.1} parent=1 // pred_check
      _
    $region55: #{tpu_custom_call.1} parent=1 // pred_check_branch
      %493 = sbr.rel (0) target = $region57
    $region56: #{tpu_custom_call.1} parent=1 // pred_region
      %s495 = ssub.s32 128, 64
      %496 = vsyncadd [#allocation7], %s495
      %s497 = sshll.u32 [#allocation6], 4
      %s498 = int_to_ptr.vmem [resolvable:$true] %s497
      %503 = dma.vmem_to_hbm [thread:$0]  %s498, 64, %s12, [#allocation7], 64, 64, 4
    $region57: #{tpu_custom_call.1} parent=1 // pred_fallthru
      _
    // Predicated region
    $region58: #{tpu_custom_call.1} parent=1 // pred_check
      _
    $region59: #{tpu_custom_call.1} parent=1 // pred_check_branch
      %505 = sbr.rel (0) target = $region61
    $region60: #{tpu_custom_call.1} parent=1 // pred_region
      %506 = dma.done [#allocation4], 128
    $region61: #{tpu_custom_call.1} parent=1 // pred_fallthru
      _
    // Predicated region
    $region62: #{tpu_custom_call.1} parent=1 // pred_check
      _
    $region63: #{tpu_custom_call.1} parent=1 // pred_check_branch
      %508 = sbr.rel (0) target = $region65
    $region64: #{tpu_custom_call.1} parent=1 // pred_region
      %509 = dma.done [#allocation7], 128
    $region65: #{tpu_custom_call.1} parent=1 // pred_fallthru
      _
    %510 = vsyncpa [#allocation3], 1
    %511 = vsyncpa [#allocation4], 1
    %512 = vsyncpa [#allocation7], 1

</llo_original>
